<compile_context>
chip_gen: v5e
topology: v5e:2x2
jax: 0.10.0
libtpu: 0.0.40
codegen_flags: <defaults>
</compile_context>

<pallas_src>
import functools

import jax
import jax.numpy as jnp
from jax.experimental import pallas as pl
from jax.experimental.pallas import tpu as pltpu


def _offset_l1_kernel(pred_ref, gt_ref, w_ref, hm_out, off_out,
                      hm_acc, off_acc, *, hw, scale):
    h = pl.program_id(1)
    nh = pl.num_programs(1)

    @pl.when(h == 0)
    def _():
        hm_acc[...] = jnp.zeros_like(hm_acc)
        off_acc[...] = jnp.zeros_like(off_acc)

    f32 = jnp.float32
    # Row block is (rows, 3*HW); the three channels are contiguous lane slabs.
    hm_p = pred_ref[:, 0 * hw:1 * hw].astype(f32)      # (rows, HW)
    ox_p = pred_ref[:, 1 * hw:2 * hw].astype(f32)
    oy_p = pred_ref[:, 2 * hw:3 * hw].astype(f32)
    hm_g = gt_ref[:, 0 * hw:1 * hw].astype(f32)
    ox_g = gt_ref[:, 1 * hw:2 * hw].astype(f32)
    oy_g = gt_ref[:, 2 * hw:3 * hw].astype(f32)
    w = w_ref[...].astype(f32)                         # (rows, 1)

    def huber(d):
        # PyTorch SmoothL1Loss (beta=1.0), elementwise; d >= 0.
        return jnp.where(d < 1.0, 0.5 * d * d, d - 0.5)

    # |w*a - w*b| == |w*(a-b)| exactly (any sign): one multiply per term.
    hm_acc[...] += huber(jnp.abs(w * (hm_p - hm_g)))
    off_acc[...] += (huber(jnp.abs(hm_g * (ox_p - ox_g))) +
                     huber(jnp.abs(hm_g * (oy_p - oy_g))))

    @pl.when(h == nh - 1)
    def _():
        hm_s = jnp.sum(hm_acc[...], keepdims=True) * scale    # (1, 1)
        off_s = jnp.sum(off_acc[...], keepdims=True) * scale
        hm_out[...] = hm_s[None]                               # (1, 1, 1)
        off_out[...] = off_s[None]


def _pick_row_tile(n_rows, row_bytes, budget_bytes):
    # Block's second-to-last dim must be a multiple of 8 or the full extent;
    # keep (pred+gt), double-buffered, within the VMEM budget.
    cands = [d for d in range(1, n_rows + 1)
             if n_rows % d == 0 and (d == n_rows or d % 8 == 0)]
    fitting = [d for d in cands if 2 * d * row_bytes <= budget_bytes]
    if not fitting:
        return min(cands)
    best = max(fitting)
    # Prefer an even total step count (so the leading "parallel" axis splits
    # rows across the two v7x TensorCores) as long as the tile stays at least
    # half of the largest fitting tile — per-step overhead stays negligible.
    even = [d for d in fitting
            if (n_rows // d) % 2 == 0 and 2 * d >= best]
    return max(even) if even else best


def offset_l1_loss(output, target, target_weight, *, use_target_weight=True,
                   reduction="mean", row_tile=None,
                   vmem_budget_bytes=20 * 1024 * 1024):
    B, C, H, W = output.shape
    assert C % 3 == 0, "channel dim must be 3 * num_joints"
    J = C // 3
    HW = H * W
    rows = B * J

    if not use_target_weight:
        # PyTorch loop adds nothing when use_target_weight is False.
        z = jnp.float32(0.0)
        return z, z
    if reduction == "mean":
        scale = 0.5 / float(B * HW * J)
    elif reduction == "sum":
        scale = 0.5
    else:
        # TODO(synk): reduction='none' (per-element SmoothL1 output) not wired up.
        raise NotImplementedError("only reduction='mean'/'sum' implemented")

    # Free reshapes only (no HBM relayout): row = (batch, joint), lanes = 3*HW.
    pred = output.reshape(rows, 3 * HW)
    gt = target.reshape(rows, 3 * HW)
    tw = target_weight.reshape(rows, 1).astype(jnp.float32)

    row_bytes = 3 * HW * (output.dtype.itemsize + target.dtype.itemsize)
    if row_tile is None:
        row_tile = _pick_row_tile(rows, row_bytes, vmem_budget_bytes)
    assert rows % row_tile == 0 and (row_tile == rows or row_tile % 8 == 0)
    n_steps = rows // row_tile
    # TODO(synk): extremely large H*W with tiny B*J would additionally need
    # spatial tiling of the 3*HW lane slab; not needed for pose-sized maps.

    # Split the row loop across two TensorCores (v7x) when it divides evenly.
    nc = 2 if (n_steps >= 2 and n_steps % 2 == 0) else 1
    per_core = n_steps // nc

    kernel = functools.partial(_offset_l1_kernel, hw=HW, scale=scale)

    hm_parts, off_parts = pl.pallas_call(
        kernel,
        out_shape=(jax.ShapeDtypeStruct((nc, 1, 1), jnp.float32),
                   jax.ShapeDtypeStruct((nc, 1, 1), jnp.float32)),
        grid_spec=pltpu.PrefetchScalarGridSpec(
            num_scalar_prefetch=0,
            grid=(nc, per_core),
            in_specs=[
                pl.BlockSpec((row_tile, 3 * HW),
                             lambda c, h: (c * per_core + h, 0)),
                pl.BlockSpec((row_tile, 3 * HW),
                             lambda c, h: (c * per_core + h, 0)),
                pl.BlockSpec((row_tile, 1),
                             lambda c, h: (c * per_core + h, 0)),
            ],
            out_specs=[
                pl.BlockSpec((1, 1, 1), lambda c, h: (c, 0, 0)),
                pl.BlockSpec((1, 1, 1), lambda c, h: (c, 0, 0)),
            ],
            scratch_shapes=[pltpu.VMEM((row_tile, HW), jnp.float32),
                            pltpu.VMEM((row_tile, HW), jnp.float32)],
        ),
        compiler_params=pltpu.CompilerParams(
            dimension_semantics=("parallel", "arbitrary"),
            vmem_limit_bytes=32 * 1024 * 1024),
    )(pred, gt, tw)

    return jnp.sum(hm_parts), jnp.sum(off_parts)


def _reference(output, target, target_weight, reduction="mean"):
    B, C, H, W = output.shape
    J = C // 3
    o = output.reshape(B, C, H * W)
    t = target.reshape(B, C, H * W)

    def sl1(a, b):
        d = jnp.abs(a - b)
        l = jnp.where(d < 1.0, 0.5 * d * d, d - 0.5)
        return jnp.mean(l) if reduction == "mean" else jnp.sum(l)

    loss_hm = 0.0
    loss_off = 0.0
    for idx in range(J):
        w = target_weight[:, idx]                        # (B, 1)
        hp, hg = o[:, idx * 3], t[:, idx * 3]
        xp, xg = o[:, idx * 3 + 1], t[:, idx * 3 + 1]
        yp, yg = o[:, idx * 3 + 2], t[:, idx * 3 + 2]
        loss_hm += 0.5 * sl1(hp * w, hg * w)
        loss_off += 0.5 * sl1(hg * xp, hg * xg)
        loss_off += 0.5 * sl1(hg * yp, hg * yg)
    if reduction == "mean":
        return loss_hm / J, loss_off / J
    return loss_hm, loss_off


if __name__ == "__main__":
    key = jax.random.PRNGKey(0)

    def _check(B, J, H, W, **kwargs):
        C = 3 * J
        k1, k2, k3 = jax.random.split(jax.random.fold_in(key, B * 100 + J), 3)
        output = jax.random.normal(k1, (B, C, H, W), dtype=jnp.float32)
        target = jax.random.normal(k2, (B, C, H, W), dtype=jnp.float32)
        target_weight = jax.random.uniform(k3, (B, J, 1), dtype=jnp.float32)

        loss_hm, loss_off = offset_l1_loss(output, target, target_weight,
                                           use_target_weight=True,
                                           reduction="mean", **kwargs)
        jax.block_until_ready((loss_hm, loss_off))
        ref_hm, ref_off = _reference(output, target, target_weight)
        assert jnp.allclose(loss_hm, ref_hm, rtol=5e-5, atol=1e-6), (loss_hm, ref_hm)
        assert jnp.allclose(loss_off, ref_off, rtol=5e-5, atol=1e-6), (loss_off, ref_off)

    # Small case: whole problem in a single grid step.
    _check(B=2, J=4, H=16, W=16)
    # Tiled + dual-core path: 32 rows / row_tile=8 -> grid (2, 2).
    _check(B=4, J=8, H=16, W=16, row_tile=8)
    # Auto tile selection: 32 rows -> row_tile=16, grid (2, 1) (even-step split).
    _check(B=4, J=8, H=16, W=16)

    print("KERNEL_OK")
</pallas_src>

<mosaic_0001>
module attributes {stable_mosaic.version = 11 : i64} {
  func.func @_offset_l1_kernel(%arg0: i32, %arg1: i32, %arg2: memref<8x768xf32, #tpu.memory_space<vmem>>, %arg3: memref<8x768xf32, #tpu.memory_space<vmem>>, %arg4: memref<8x1xf32, #tpu.memory_space<vmem>>, %arg5: memref<1x1x1xf32, #tpu.memory_space<vmem>>, %arg6: memref<1x1x1xf32, #tpu.memory_space<vmem>>, %arg7: memref<8x256xf32, #tpu.memory_space<vmem>>, %arg8: memref<8x256xf32, #tpu.memory_space<vmem>>) attributes {dimension_semantics = [#tpu.dimension_semantics<parallel>, #tpu.dimension_semantics<arbitrary>], iteration_bounds = array<i64: 1, 1>, scalar_prefetch = 0 : i64, scratch_operands = 2 : i64, tpu.core_type = #tpu.core_type<tc>, window_params = [{transform_indices = @transform_0, window_bounds = array<i64: 8, 768>}, {transform_indices = @transform_1, window_bounds = array<i64: 8, 768>}, {transform_indices = @transform_2, window_bounds = array<i64: 8, 1>}, {transform_indices = @transform_3, window_bounds = array<i64: 1, 1, 1>}, {transform_indices = @transform_4, window_bounds = array<i64: 1, 1, 1>}]} {
    %c0_i32 = arith.constant 0 : i32
    %0 = arith.cmpi eq, %arg1, %c0_i32 : i32
    %1 = arith.extui %0 : i1 to i32
    %c0_i32_0 = arith.constant 0 : i32
    %2 = arith.cmpi ne, %1, %c0_i32_0 : i32
    scf.if %2 {
      %cst_30 = arith.constant 0.000000e+00 : f32
      %54 = vector.broadcast %cst_30 : f32 to vector<8x256xf32>
      %c0_31 = arith.constant 0 : index
      %c0_32 = arith.constant 0 : index
      %55 = vector.load %arg7[%c0_31, %c0_32] : memref<8x256xf32, #tpu.memory_space<vmem>>, vector<8x256xf32>
      tpu.vector_store %arg7[%c0_31, %c0_32], %54 {strides = array<i32>} : memref<8x256xf32, #tpu.memory_space<vmem>>, vector<8x256xf32>,
      %cst_33 = arith.constant 0.000000e+00 : f32
      %56 = vector.broadcast %cst_33 : f32 to vector<8x256xf32>
      %c0_34 = arith.constant 0 : index
      %c0_35 = arith.constant 0 : index
      %57 = vector.load %arg8[%c0_34, %c0_35] : memref<8x256xf32, #tpu.memory_space<vmem>>, vector<8x256xf32>
      tpu.vector_store %arg8[%c0_34, %c0_35], %56 {strides = array<i32>} : memref<8x256xf32, #tpu.memory_space<vmem>>, vector<8x256xf32>,
    } else {
    }
    %c0 = arith.constant 0 : index
    %c0_1 = arith.constant 0 : index
    %3 = vector.load %arg2[%c0, %c0_1] : memref<8x768xf32, #tpu.memory_space<vmem>>, vector<8x256xf32>
    %c0_2 = arith.constant 0 : index
    %c256 = arith.constant 256 : index
    %4 = vector.load %arg2[%c0_2, %c256] : memref<8x768xf32, #tpu.memory_space<vmem>>, vector<8x256xf32>
    %c0_3 = arith.constant 0 : index
    %c512 = arith.constant 512 : index
    %5 = vector.load %arg2[%c0_3, %c512] : memref<8x768xf32, #tpu.memory_space<vmem>>, vector<8x256xf32>
    %c0_4 = arith.constant 0 : index
    %c0_5 = arith.constant 0 : index
    %6 = vector.load %arg3[%c0_4, %c0_5] : memref<8x768xf32, #tpu.memory_space<vmem>>, vector<8x256xf32>
    %c0_6 = arith.constant 0 : index
    %c256_7 = arith.constant 256 : index
    %7 = vector.load %arg3[%c0_6, %c256_7] : memref<8x768xf32, #tpu.memory_space<vmem>>, vector<8x256xf32>
    %c0_8 = arith.constant 0 : index
    %c512_9 = arith.constant 512 : index
    %8 = vector.load %arg3[%c0_8, %c512_9] : memref<8x768xf32, #tpu.memory_space<vmem>>, vector<8x256xf32>
    %c0_10 = arith.constant 0 : index
    %c0_11 = arith.constant 0 : index
    %9 = vector.load %arg4[%c0_10, %c0_11] : memref<8x1xf32, #tpu.memory_space<vmem>>, vector<8x1xf32>
    %c0_12 = arith.constant 0 : index
    %c0_13 = arith.constant 0 : index
    %10 = vector.load %arg7[%c0_12, %c0_13] : memref<8x256xf32, #tpu.memory_space<vmem>>, vector<8x256xf32>
    %11 = arith.subf %3, %6 : vector<8x256xf32>
    %12 = vector.broadcast %9 : vector<8x1xf32> to vector<8x256xf32>
    %13 = arith.mulf %12, %11 : vector<8x256xf32>
    %14 = math.absf %13 : vector<8x256xf32>
    %cst = arith.constant 1.000000e+00 : f32
    %15 = vector.broadcast %cst : f32 to vector<8x256xf32>
    %16 = arith.cmpf olt, %14, %15 : vector<8x256xf32>
    %cst_14 = arith.constant 5.000000e-01 : f32
    %17 = vector.broadcast %cst_14 : f32 to vector<8x256xf32>
    %18 = arith.mulf %17, %14 : vector<8x256xf32>
    %19 = arith.mulf %18, %14 : vector<8x256xf32>
    %cst_15 = arith.constant 5.000000e-01 : f32
    %20 = vector.broadcast %cst_15 : f32 to vector<8x256xf32>
    %21 = arith.subf %14, %20 : vector<8x256xf32>
    %22 = arith.select %16, %19, %21 : vector<8x256xi1>, vector<8x256xf32>
    %23 = arith.addf %10, %22 : vector<8x256xf32>
    %c0_16 = arith.constant 0 : index
    %c0_17 = arith.constant 0 : index
    %24 = vector.load %arg7[%c0_16, %c0_17] : memref<8x256xf32, #tpu.memory_space<vmem>>, vector<8x256xf32>
    tpu.vector_store %arg7[%c0_16, %c0_17], %23 {strides = array<i32>} : memref<8x256xf32, #tpu.memory_space<vmem>>, vector<8x256xf32>,
    %c0_18 = arith.constant 0 : index
    %c0_19 = arith.constant 0 : index
    %25 = vector.load %arg8[%c0_18, %c0_19] : memref<8x256xf32, #tpu.memory_space<vmem>>, vector<8x256xf32>
    %26 = arith.subf %4, %7 : vector<8x256xf32>
    %27 = arith.mulf %6, %26 : vector<8x256xf32>
    %28 = math.absf %27 : vector<8x256xf32>
    %cst_20 = arith.constant 1.000000e+00 : f32
    %29 = vector.broadcast %cst_20 : f32 to vector<8x256xf32>
    %30 = arith.cmpf olt, %28, %29 : vector<8x256xf32>
    %cst_21 = arith.constant 5.000000e-01 : f32
    %31 = vector.broadcast %cst_21 : f32 to vector<8x256xf32>
    %32 = arith.mulf %31, %28 : vector<8x256xf32>
    %33 = arith.mulf %32, %28 : vector<8x256xf32>
    %cst_22 = arith.constant 5.000000e-01 : f32
    %34 = vector.broadcast %cst_22 : f32 to vector<8x256xf32>
    %35 = arith.subf %28, %34 : vector<8x256xf32>
    %36 = arith.select %30, %33, %35 : vector<8x256xi1>, vector<8x256xf32>
    %37 = arith.subf %5, %8 : vector<8x256xf32>
    %38 = arith.mulf %6, %37 : vector<8x256xf32>
    %39 = math.absf %38 : vector<8x256xf32>
    %cst_23 = arith.constant 1.000000e+00 : f32
    %40 = vector.broadcast %cst_23 : f32 to vector<8x256xf32>
    %41 = arith.cmpf olt, %39, %40 : vector<8x256xf32>
    %cst_24 = arith.constant 5.000000e-01 : f32
    %42 = vector.broadcast %cst_24 : f32 to vector<8x256xf32>
    %43 = arith.mulf %42, %39 : vector<8x256xf32>
    %44 = arith.mulf %43, %39 : vector<8x256xf32>
    %cst_25 = arith.constant 5.000000e-01 : f32
    %45 = vector.broadcast %cst_25 : f32 to vector<8x256xf32>
    %46 = arith.subf %39, %45 : vector<8x256xf32>
    %47 = arith.select %41, %44, %46 : vector<8x256xi1>, vector<8x256xf32>
    %48 = arith.addf %36, %47 : vector<8x256xf32>
    %49 = arith.addf %25, %48 : vector<8x256xf32>
    %c0_26 = arith.constant 0 : index
    %c0_27 = arith.constant 0 : index
    %50 = vector.load %arg8[%c0_26, %c0_27] : memref<8x256xf32, #tpu.memory_space<vmem>>, vector<8x256xf32>
    tpu.vector_store %arg8[%c0_26, %c0_27], %49 {strides = array<i32>} : memref<8x256xf32, #tpu.memory_space<vmem>>, vector<8x256xf32>,
    %c0_i32_28 = arith.constant 0 : i32
    %51 = arith.cmpi eq, %arg1, %c0_i32_28 : i32
    %52 = arith.extui %51 : i1 to i32
    %c0_i32_29 = arith.constant 0 : i32
    %53 = arith.cmpi ne, %52, %c0_i32_29 : i32
    scf.if %53 {
      %c0_30 = arith.constant 0 : index
      %c0_31 = arith.constant 0 : index
      %54 = vector.load %arg7[%c0_30, %c0_31] : memref<8x256xf32, #tpu.memory_space<vmem>>, vector<8x256xf32>
      %55 = vector.shape_cast %54 : vector<8x256xf32> to vector<1x8x256xf32>
      %cst_32 = arith.constant dense<0.000000e+00> : vector<1xf32>
      %56 = vector.multi_reduction <add>, %55, %cst_32 [1, 2] : vector<1x8x256xf32> to vector<1xf32>
      %57 = vector.shape_cast %56 : vector<1xf32> to vector<1x1x1xf32>
      %58 = vector.extract %57[0, 0, 0] : f32 from vector<1x1x1xf32>
      %59 = vector.broadcast %58 : f32 to vector<1x1xf32>
      %cst_33 = arith.constant 2.44140625E-4 : f32
      %60 = vector.broadcast %cst_33 : f32 to vector<1x1xf32>
      %61 = arith.mulf %59, %60 : vector<1x1xf32>
      %c0_34 = arith.constant 0 : index
      %c0_35 = arith.constant 0 : index
      %62 = vector.load %arg8[%c0_34, %c0_35] : memref<8x256xf32, #tpu.memory_space<vmem>>, vector<8x256xf32>
      %63 = vector.shape_cast %62 : vector<8x256xf32> to vector<1x8x256xf32>
      %cst_36 = arith.constant dense<0.000000e+00> : vector<1xf32>
      %64 = vector.multi_reduction <add>, %63, %cst_36 [1, 2] : vector<1x8x256xf32> to vector<1xf32>
      %65 = vector.shape_cast %64 : vector<1xf32> to vector<1x1x1xf32>
      %66 = vector.extract %65[0, 0, 0] : f32 from vector<1x1x1xf32>
      %67 = vector.broadcast %66 : f32 to vector<1x1xf32>
      %cst_37 = arith.constant 2.44140625E-4 : f32
      %68 = vector.broadcast %cst_37 : f32 to vector<1x1xf32>
      %69 = arith.mulf %67, %68 : vector<1x1xf32>
      %70 = vector.shape_cast %61 : vector<1x1xf32> to vector<1x1x1xf32>
      %c0_38 = arith.constant 0 : index
      %c0_39 = arith.constant 0 : index
      %c0_40 = arith.constant 0 : index
      %71 = vector.load %arg5[%c0_38, %c0_39, %c0_40] : memref<1x1x1xf32, #tpu.memory_space<vmem>>, vector<1x1x1xf32>
      tpu.vector_store %arg5[%c0_38, %c0_39, %c0_40], %70 {strides = array<i32>} : memref<1x1x1xf32, #tpu.memory_space<vmem>>, vector<1x1x1xf32>,
      %72 = vector.shape_cast %69 : vector<1x1xf32> to vector<1x1x1xf32>
      %c0_41 = arith.constant 0 : index
      %c0_42 = arith.constant 0 : index
      %c0_43 = arith.constant 0 : index
      %73 = vector.load %arg6[%c0_41, %c0_42, %c0_43] : memref<1x1x1xf32, #tpu.memory_space<vmem>>, vector<1x1x1xf32>
      tpu.vector_store %arg6[%c0_41, %c0_42, %c0_43], %72 {strides = array<i32>} : memref<1x1x1xf32, #tpu.memory_space<vmem>>, vector<1x1x1xf32>,
    } else {
    }
    return
  }
  func.func @transform_0(%arg0: i32, %arg1: i32) -> (i32, i32) {
    %c1_i32 = arith.constant 1 : i32
    %0 = arith.muli %arg0, %c1_i32 : i32
    %1 = arith.addi %0, %arg1 : i32
    %c0_i32 = arith.constant 0 : i32
    %c0_i32_0 = arith.constant 0 : i32
    return %1, %c0_i32 : i32, i32
  }
  func.func @transform_1(%arg0: i32, %arg1: i32) -> (i32, i32) {
    %c1_i32 = arith.constant 1 : i32
    %0 = arith.muli %arg0, %c1_i32 : i32
    %1 = arith.addi %0, %arg1 : i32
    %c0_i32 = arith.constant 0 : i32
    %c0_i32_0 = arith.constant 0 : i32
    return %1, %c0_i32 : i32, i32
  }
  func.func @transform_2(%arg0: i32, %arg1: i32) -> (i32, i32) {
    %c1_i32 = arith.constant 1 : i32
    %0 = arith.muli %arg0, %c1_i32 : i32
    %1 = arith.addi %0, %arg1 : i32
    %c0_i32 = arith.constant 0 : i32
    %c0_i32_0 = arith.constant 0 : i32
    return %1, %c0_i32 : i32, i32
  }
  func.func @transform_3(%arg0: i32, %arg1: i32) -> (i32, i32, i32) {
    %c0_i32 = arith.constant 0 : i32
    %c0_i32_0 = arith.constant 0 : i32
    %c0_i32_1 = arith.constant 0 : i32
    return %arg0, %c0_i32, %c0_i32_0 : i32, i32, i32
  }
  func.func @transform_4(%arg0: i32, %arg1: i32) -> (i32, i32, i32) {
    %c0_i32 = arith.constant 0 : i32
    %c0_i32_0 = arith.constant 0 : i32
    %c0_i32_1 = arith.constant 0 : i32
    return %arg0, %c0_i32, %c0_i32_0 : i32, i32, i32
  }
}

</mosaic_0001>

<llo_original>
// kernel: tpu_custom_call.1
$region0: #{tpu_custom_call.1}
  #allocation0 [shape = 'u32[]', space=smem, size = 0x4, offset = 0x4, fixed_abs, tag = 'smem constant byte address 0x4 - core index']
  #allocation1 [shape = 'u32[72,128]{1,0:T(1,128)}', space=vmem, size = 0x9000, scoped, tag = 'internal scratch']
  #allocation2 [shape = 'f32[8,256]{1,0:T(8,128)}', space=vmem, size = 0x2000, scoped, tag = 'scratch operand']
  #allocation3 [shape = 'f32[8,256]{1,0:T(8,128)}', space=vmem, size = 0x2000, scoped, tag = 'scratch operand']
  %s0 = inlined_call_operand.hbm [shape: f32[8,768], index: 0, kind: input, shape index: {}]
  %s1 = inlined_call_operand.hbm [shape: f32[8,768], index: 1, kind: input, shape index: {}]
  %s2 = inlined_call_operand.vmem [shape: f32[8,1], index: 2, kind: input, shape index: {}]
  %s3 = inlined_call_operand.hbm [shape: f32[1,1,1], index: 3, kind: output, shape index: {0}]
  %s4 = inlined_call_operand.hbm [shape: f32[1,1,1], index: 4, kind: output, shape index: {1}]
  %5 = xla_tuple %s3, %s4
  %s6 = sld [smem:[#allocation0]]
  $region46: #{tpu_custom_call.1} parent=0
    _
  %s8 = ssub.s32 1, %s6
  %s9 = scalar_select 0, %s8, %s6
  $region1: #{tpu_custom_call.1} parent=0
    #allocation4 [shape = 'u8[24576]{0}', space=vmem, size = 0x6000, scoped, tag = 'input window, operand 0, single buffered']
    #allocation5 [shape = 's32[1]{0}', space=sflag, size = 0x4, scoped, tag = 'scoped memory for tpu_custom_call.1']
    #allocation6 [shape = 's32[1]{0}', space=sflag, size = 0x4, scoped, tag = 'scoped memory for tpu_custom_call.1']
    #allocation7 [shape = 'u8[24576]{0}', space=vmem, size = 0x6000, scoped, tag = 'input window, operand 1, single buffered']
    #allocation8 [shape = 's32[1]{0}', space=sflag, size = 0x4, scoped, tag = 'scoped memory for tpu_custom_call.1']
    #allocation9 [shape = 'u8[512]{0}', space=vmem, size = 0x400, scoped, tag = 'output window, operand 0, single buffered']
    #allocation10 [shape = 'u8[512]{0}', space=vmem, size = 0x400, scoped, tag = 'output window, operand 1, single buffered']
    #allocation11 [shape = 's32[1]{0}', space=sflag, size = 0x4, scoped, tag = 'scoped memory for tpu_custom_call.1']
    %10 = vsyncpa [#allocation5], 0
    %11 = vsyncpa [#allocation8], 0
    %12 = vsyncpa [#allocation6], 0
    %13 = vsyncpa [#allocation11], 0
    // Predicated region
    $region2: #{tpu_custom_call.1} parent=1 // pred_check
      _
    $region3: #{tpu_custom_call.1} parent=1 // pred_check_branch
      %15 = sbr.rel (0) target = $region5
    $region4: #{tpu_custom_call.1} parent=1 // pred_region
      %s16 = sadd.s32 0, 0
      %18 = vsyncadd [#allocation5], 0
      %s19 = smul.addr %s16, 6
      %s20 = smul.addr %s19, 8
      %s21 = scalar_lea.hbm %s0, %s20
      %s23 = sshll.u32 %s21, 4
      %s24 = int_to_ptr.hbm [resolvable:$true] %s23
      %s25 = sshll.u32 [#allocation4], 4
      %s26 = int_to_ptr.vmem [resolvable:$true] %s25
      %28 = dma.hbm_to_vmem [thread:$0]  %s24, 768, %s26, [#allocation5]
    $region5: #{tpu_custom_call.1} parent=1 // pred_fallthru
      _
    // Predicated region
    $region6: #{tpu_custom_call.1} parent=1 // pred_check
      _
    $region7: #{tpu_custom_call.1} parent=1 // pred_check_branch
      %30 = sbr.rel (0) target = $region9
    $region8: #{tpu_custom_call.1} parent=1 // pred_region
      %s31 = sadd.s32 0, 0
      %33 = vsyncadd [#allocation8], 0
      %s34 = smul.addr %s31, 6
      %s35 = smul.addr %s34, 8
      %s36 = scalar_lea.hbm %s1, %s35
      %s38 = sshll.u32 %s36, 4
      %s39 = int_to_ptr.hbm [resolvable:$true] %s38
      %s40 = sshll.u32 [#allocation7], 4
      %s41 = int_to_ptr.vmem [resolvable:$true] %s40
      %43 = dma.hbm_to_vmem [thread:$0]  %s39, 768, %s41, [#allocation8]
    $region9: #{tpu_custom_call.1} parent=1 // pred_fallthru
      _
    // Predicated region
    $region10: #{tpu_custom_call.1} parent=1 // pred_check
      _
    $region11: #{tpu_custom_call.1} parent=1 // pred_check_branch
      %45 = sbr.rel (0) target = $region13
    $region12: #{tpu_custom_call.1} parent=1 // pred_region
      %s46 = sadd.s32 0, 0
      %p47 = scmp.lt.s32.totalorder %s46, 0
      %s48 = scalar_select %p47, %s46, 0
      %s49 = smul.addr %s48, 8
      %s50 = scalar_lea.vmem %s2, %s49
      %s51 = sadd.s32 0, 0
    $region13: #{tpu_custom_call.1} parent=1 // pred_fallthru
      _
    // Predicated region
    $region14: #{tpu_custom_call.1} parent=1 // pred_check
      _
    $region15: #{tpu_custom_call.1} parent=1 // pred_check_branch
      %53 = sbr.rel (0) target = $region17
    $region16: #{tpu_custom_call.1} parent=1 // pred_region
      %55 = dma.done [#allocation5], 768
    $region17: #{tpu_custom_call.1} parent=1 // pred_fallthru
      _
    // Predicated region
    $region18: #{tpu_custom_call.1} parent=1 // pred_check
      _
    $region19: #{tpu_custom_call.1} parent=1 // pred_check_branch
      %57 = sbr.rel (0) target = $region21
    $region20: #{tpu_custom_call.1} parent=1 // pred_region
      %59 = dma.done [#allocation8], 768
    $region21: #{tpu_custom_call.1} parent=1 // pred_fallthru
      _
    %s60 = sadd.s32 0, 0
    %p61 = scmp.lt.s32.totalorder %s60, 0
    %s62 = scalar_select %p61, %s60, 0
    %s63 = smul.addr %s62, 8
    %s64 = scalar_lea.vmem %s2, %s63
    %s65 = sadd.s32 0, 0
    %s66 = sadd.s32 0, 0
    %s67 = sadd.s32 0, 0
    %p68 = scmp.lt.s32.totalorder %s67, 0
    %s69 = scalar_select %p68, %s67, 0
    %s70 = smul.addr %s69, 8
    %s71 = scalar_lea.vmem %s2, %s70
    %s72 = sadd.s32 0, 0
    %p73 = scmp.eq.s32.totalorder 0, 0
    // Predicated region
    $region22: #{tpu_custom_call.1} parent=1 // pred_check
      %p74 = pneg %p73
    $region23: #{tpu_custom_call.1} parent=1 // pred_check_branch
      %76 = sbr.rel (%p74) target = $region25
    $region24: #{tpu_custom_call.1} parent=1 // pred_region
      %77 = vst [vmem:[#allocation2] sm:$0xff] 0.0
      %78 = vst [vmem:[#allocation2 + $0x8] sm:$0xff] 0.0
      %79 = vst [vmem:[#allocation3] sm:$0xff] 0.0
      %80 = vst [vmem:[#allocation3 + $0x8] sm:$0xff] 0.0
    $region25: #{tpu_custom_call.1} parent=1 // pred_fallthru
      _
    %v81 = vld [vmem:[#allocation4] sm:$0xff]
    %v82 = vld [vmem:[#allocation4 + $0x8] sm:$0xff]
    %v83 = vld [vmem:[#allocation4 + $0x10] sm:$0xff]
    %v84 = vld [vmem:[#allocation4 + $0x18] sm:$0xff]
    %v85 = vld [vmem:[#allocation4 + $0x20] sm:$0xff]
    %v86 = vld [vmem:[#allocation4 + $0x28] sm:$0xff]
    %v87 = vld [vmem:[#allocation7] sm:$0xff]
    %v88 = vld [vmem:[#allocation7 + $0x8] sm:$0xff]
    %v89 = vld [vmem:[#allocation7 + $0x10] sm:$0xff]
    %v90 = vld [vmem:[#allocation7 + $0x18] sm:$0xff]
    %v91 = vld [vmem:[#allocation7 + $0x20] sm:$0xff]
    %v92 = vld [vmem:[#allocation7 + $0x28] sm:$0xff]
    %v93 = vld [vmem:[%s71] sm:$0xff]
    %v94 = vld [vmem:[#allocation2] sm:$0xff]
    %v95 = vld [vmem:[#allocation2 + $0x8] sm:$0xff]
    %v96 = vsub.f32 %v81, %v87
    %v97 = vsub.f32 %v82, %v88
    %99 = vset.pattern.permute.xlu0 0
    %100 = vperm.xlu0 %99, %v93
    %v101 = vpop.permute.xlu0 %100
    %v103 = vmul.f32 %v101, %v96
    %v104 = vmul.f32 %v101, %v97
    %v105 = vand.u32 2147483647, %v103
    %v106 = vand.u32 2147483647, %v104
    %vm107 = vcmp.lt.f32.partialorder %v105, 1.0
    %vm108 = vcmp.lt.f32.partialorder %v106, 1.0
    %v109 = vmul.f32 %v105, 0.5
    %v110 = vmul.f32 %v106, 0.5
    %v111 = vmul.f32 %v109, %v105
    %v112 = vmul.f32 %v110, %v106
    %v113 = vsub.f32 %v105, 0.5
    %v114 = vsub.f32 %v106, 0.5
    %v115 = vsel %vm107, %v111, %v113
    %v116 = vsel %vm108, %v112, %v114
    %v117 = vadd.f32 %v94, %v115
    %v118 = vadd.f32 %v95, %v116
    %119 = vst [vmem:[#allocation2] sm:$0xff] %v117
    %120 = vst [vmem:[#allocation2 + $0x8] sm:$0xff] %v118
    %v121 = vld [vmem:[#allocation3] sm:$0xff]
    %v122 = vld [vmem:[#allocation3 + $0x8] sm:$0xff]
    %v123 = vsub.f32 %v83, %v89
    %v124 = vsub.f32 %v84, %v90
    %v125 = vmul.f32 %v87, %v123
    %v126 = vmul.f32 %v88, %v124
    %v127 = vand.u32 2147483647, %v125
    %v128 = vand.u32 2147483647, %v126
    %vm129 = vcmp.lt.f32.partialorder %v127, 1.0
    %vm130 = vcmp.lt.f32.partialorder %v128, 1.0
    %v131 = vmul.f32 %v127, 0.5
    %v132 = vmul.f32 %v128, 0.5
    %v133 = vmul.f32 %v131, %v127
    %v134 = vmul.f32 %v132, %v128
    %v135 = vsub.f32 %v127, 0.5
    %v136 = vsub.f32 %v128, 0.5
    %v137 = vsel %vm129, %v133, %v135
    %v138 = vsel %vm130, %v134, %v136
    %v139 = vsub.f32 %v85, %v91
    %v140 = vsub.f32 %v86, %v92
    %v141 = vmul.f32 %v87, %v139
    %v142 = vmul.f32 %v88, %v140
    %v143 = vand.u32 2147483647, %v141
    %v144 = vand.u32 2147483647, %v142
    %vm145 = vcmp.lt.f32.partialorder %v143, 1.0
    %vm146 = vcmp.lt.f32.partialorder %v144, 1.0
    %v147 = vmul.f32 %v143, 0.5
    %v148 = vmul.f32 %v144, 0.5
    %v149 = vmul.f32 %v147, %v143
    %v150 = vmul.f32 %v148, %v144
    %v151 = vsub.f32 %v143, 0.5
    %v152 = vsub.f32 %v144, 0.5
    %v153 = vsel %vm145, %v149, %v151
    %v154 = vsel %vm146, %v150, %v152
    %v155 = vadd.f32 %v137, %v153
    %v156 = vadd.f32 %v138, %v154
    %v157 = vadd.f32 %v121, %v155
    %v158 = vadd.f32 %v122, %v156
    %159 = vst [vmem:[#allocation3] sm:$0xff] %v157
    %160 = vst [vmem:[#allocation3 + $0x8] sm:$0xff] %v158
    // Predicated region
    $region26: #{tpu_custom_call.1} parent=1 // pred_check
      %p161 = pneg %p73
    $region27: #{tpu_custom_call.1} parent=1 // pred_check_branch
      %163 = sbr.rel (%p161) target = $region29
    $region28: #{tpu_custom_call.1} parent=1 // pred_region
      %v164 = vld [vmem:[#allocation2] sm:$0xff]
      %v165 = vld [vmem:[#allocation2 + $0x8] sm:$0xff]
      %v166 = vadd.f32 %v164, %v165
      %167 = vadd.xlane.f32.xlu0 %v166
      %v168 = vpop.xlane.xlu0 %167
      %v169 = vrot.slane %v168, 4
      %v170 = vadd.f32 %v168, %v169
      %v171 = vrot.slane %v170, 2
      %v172 = vadd.f32 %v170, %v171
      %v173 = vrot.slane %v172, 1
      %v174 = vadd.f32 %v172, %v173
      %s175 = vtos %v174
      %v176 = vstv %s175
      %v177 = vmul.f32 %v176, 0.00024414063
      %v178 = vld [vmem:[#allocation3] sm:$0xff]
      %v179 = vld [vmem:[#allocation3 + $0x8] sm:$0xff]
      %v180 = vadd.f32 %v178, %v179
      %181 = vadd.xlane.f32.xlu0 %v180
      %v182 = vpop.xlane.xlu0 %181
      %v183 = vrot.slane %v182, 4
      %v184 = vadd.f32 %v182, %v183
      %v185 = vrot.slane %v184, 2
      %v186 = vadd.f32 %v184, %v185
      %v187 = vrot.slane %v186, 1
      %v188 = vadd.f32 %v186, %v187
      %s189 = vtos %v188
      %v190 = vstv %s189
      %v191 = vmul.f32 %v190, 0.00024414063
      %vm192 = vcmask 0
      %193 = vst.msk [vmem:[#allocation9] sm:$0x1] %vm192, %v177
      %194 = vst.msk [vmem:[#allocation10] sm:$0x1] %vm192, %v191
    $region29: #{tpu_custom_call.1} parent=1 // pred_fallthru
      _
    // Predicated region
    $region30: #{tpu_custom_call.1} parent=1 // pred_check
      _
    $region31: #{tpu_custom_call.1} parent=1 // pred_check_branch
      %196 = sbr.rel (0) target = $region33
    $region32: #{tpu_custom_call.1} parent=1 // pred_region
      %198 = vsyncadd [#allocation6], 0
      %s200 = sshll.u32 [#allocation9], 4
      %s201 = int_to_ptr.vmem [resolvable:$true] %s200
      %s202 = sshll.u32 %s3, 4
      %s203 = int_to_ptr.hbm [resolvable:$true] %s202
      %205 = dma.vmem_to_hbm [thread:$0]  %s201, 16, %s203, [#allocation6]
    $region33: #{tpu_custom_call.1} parent=1 // pred_fallthru
      _
    // Predicated region
    $region34: #{tpu_custom_call.1} parent=1 // pred_check
      _
    $region35: #{tpu_custom_call.1} parent=1 // pred_check_branch
      %207 = sbr.rel (0) target = $region37
    $region36: #{tpu_custom_call.1} parent=1 // pred_region
      %209 = vsyncadd [#allocation11], 0
      %s211 = sshll.u32 [#allocation10], 4
      %s212 = int_to_ptr.vmem [resolvable:$true] %s211
      %s213 = sshll.u32 %s4, 4
      %s214 = int_to_ptr.hbm [resolvable:$true] %s213
      %216 = dma.vmem_to_hbm [thread:$0]  %s212, 16, %s214, [#allocation11]
    $region37: #{tpu_custom_call.1} parent=1 // pred_fallthru
      _
    // Predicated region
    $region38: #{tpu_custom_call.1} parent=1 // pred_check
      _
    $region39: #{tpu_custom_call.1} parent=1 // pred_check_branch
      %218 = sbr.rel (0) target = $region41
    $region40: #{tpu_custom_call.1} parent=1 // pred_region
      %220 = dma.done [#allocation6], 16
    $region41: #{tpu_custom_call.1} parent=1 // pred_fallthru
      _
    // Predicated region
    $region42: #{tpu_custom_call.1} parent=1 // pred_check
      _
    $region43: #{tpu_custom_call.1} parent=1 // pred_check_branch
      %222 = sbr.rel (0) target = $region45
    $region44: #{tpu_custom_call.1} parent=1 // pred_region
      %224 = dma.done [#allocation11], 16
    $region45: #{tpu_custom_call.1} parent=1 // pred_fallthru
      _
    %225 = vsyncpa [#allocation5], 1
    %226 = vsyncpa [#allocation8], 1
    %227 = vsyncpa [#allocation6], 1
    %228 = vsyncpa [#allocation11], 1

</llo_original>
